<compile_context>
chip_gen: v6e
topology: v6e:2x2x1
jax: 0.10.0
libtpu: 0.0.40
codegen_flags: <defaults>
</compile_context>

<pallas_src>
import math
from functools import partial

import jax
import jax.numpy as jnp
from jax.experimental import pallas as pl
from jax.experimental.pallas import tpu as pltpu


def _round_up(x, m):
    return (x + m - 1) // m * m


# ----------------------------- tiled projection GEMM ----------------------------- #

def _matmul_kernel(x_ref, w_ref, o_ref, acc_ref):
    @pl.when(pl.program_id(2) == 0)
    def _():
        acc_ref[...] = jnp.zeros_like(acc_ref)

    acc_ref[...] += jnp.dot(x_ref[...], w_ref[...], preferred_element_type=jnp.float32)

    @pl.when(pl.program_id(2) == pl.num_programs(2) - 1)
    def _():
        o_ref[...] = acc_ref[...].astype(o_ref.dtype)


def pallas_matmul(x, w, *, tm=256, tn=256, tk=256, out_dtype=jnp.float32):
    """(M,K) @ (K,N) -> (M,N); bf16 operands, f32 accumulation; pads to tile multiples."""
    M, K = x.shape
    K2, N = w.shape
    assert K == K2
    tm = min(tm, _round_up(M, 8))
    tk = min(tk, _round_up(K, 128))
    tn = min(tn, _round_up(N, 128))
    Mp, Kp, Np = _round_up(M, tm), _round_up(K, tk), _round_up(N, tn)
    xb = jnp.pad(x.astype(jnp.bfloat16), ((0, Mp - M), (0, Kp - K)))
    wb = jnp.pad(w.astype(jnp.bfloat16), ((0, Kp - K), (0, Np - N)))
    out = pl.pallas_call(
        _matmul_kernel,
        out_shape=jax.ShapeDtypeStruct((Mp, Np), out_dtype),
        grid_spec=pltpu.PrefetchScalarGridSpec(
            num_scalar_prefetch=0,
            grid=(Mp // tm, Np // tn, Kp // tk),
            in_specs=[pl.BlockSpec((tm, tk), lambda i, j, k: (i, k)),
                      pl.BlockSpec((tk, tn), lambda i, j, k: (k, j))],
            out_specs=pl.BlockSpec((tm, tn), lambda i, j, k: (i, j)),
            scratch_shapes=[pltpu.VMEM((tm, tn), jnp.float32)]),
        compiler_params=pltpu.CompilerParams(
            dimension_semantics=("parallel", "parallel", "arbitrary")),
    )(xb, wb)
    return out[:M, :N]


# --------------------------- flash-style CoPE attention --------------------------- #

def _cope_attn_kernel(q_ref, k_ref, v_ref, pe_ref, o_ref,
                      m_sc, l_sc, carry_sc, acc_sc, qpe_sc,
                      *, npos_max, seq_len, block_q, block_k):
    f32 = jnp.float32
    NEG = jnp.finfo(f32).min
    D = q_ref.shape[-1]

    i = pl.program_id(2)
    j = pl.program_id(3)
    nkb = pl.num_programs(3)
    kv_block = nkb - 1 - j                  # kv blocks visited in reverse order
    q_start = i * block_q
    kv_start = kv_block * block_k

    @pl.when(j == 0)
    def _init():
        m_sc[...] = jnp.full((block_q, 1), NEG, f32)
        l_sc[...] = jnp.zeros((block_q, 1), f32)
        carry_sc[...] = jnp.zeros((block_q, 1), f32)
        acc_sc[...] = jnp.zeros((block_q, D), f32)
        # positional logits Q @ pos_emb, hoisted out of the kv loop (pos_emb pre-scaled
        # by sqrt(D) in the wrapper to undo the 1/sqrt(D) folded into Q).
        qpe_sc[...] = jnp.dot(q_ref[0, 0], pe_ref[...], preferred_element_type=f32)

    # Skip kv blocks entirely above the causal diagonal (they contribute nothing).
    @pl.when(kv_start <= q_start + block_q - 1)
    def _compute():
        q = q_ref[0, 0]                     # (Tq, D)  bf16, pre-scaled by 1/sqrt(D)
        k = k_ref[0, 0]                     # (Tk, D)  bf16
        v = v_ref[0, 0]                     # (Tk, D)  bf16

        # Q K^T without an explicit transpose (contract the D axes directly).
        s = jax.lax.dot_general(q, k, (((1,), (1,)), ((), ())),
                                preferred_element_type=f32)       # (Tq, Tk) f32

        # Causal + padding mask rebuilt in-kernel (no streamed mask operand).
        row = q_start + jax.lax.broadcasted_iota(jnp.int32, (block_q, block_k), 0)
        col = kv_start + jax.lax.broadcasted_iota(jnp.int32, (block_q, block_k), 1)
        masked = jnp.logical_or(col > row, col >= seq_len)

        # CoPE gates; masked keys contribute exactly 0 (== sigmoid(x + finfo.min)).
        gates = jnp.where(masked, 0.0, jax.nn.sigmoid(s))

        # Reverse cumulative sum of gates over keys:
        #   within-block suffix sum via a small (Tk,Tk) triangular MXU matmul, plus
        #   the carry of gate sums from already-processed (later) kv blocks.
        r_ids = jax.lax.broadcasted_iota(jnp.int32, (block_k, block_k), 0)
        c_ids = jax.lax.broadcasted_iota(jnp.int32, (block_k, block_k), 1)
        tri = (r_ids >= c_ids).astype(f32)
        carry = carry_sc[...]                                     # (Tq, 1)
        pos = jnp.dot(gates, tri, preferred_element_type=f32) + carry
        pos = jnp.minimum(pos, f32(npos_max - 1))                 # clamp(max=npos_max-1)
        carry_sc[...] = carry + jnp.sum(gates, axis=-1, keepdims=True)

        # Interpolated positional logits via the hat function
        # (== gather(ceil)*w + gather(floor)*(1-w)), accumulated in place into attn.
        li = qpe_sc[...]                                          # (Tq, npos) f32
        attn = s
        d = pos
        for p in range(npos_max):
            hat = jnp.maximum(0.0, 1.0 - jnp.abs(d))
            attn = attn + li[:, p:p + 1] * hat
            d = d - 1.0

        # Online softmax with masked_fill(min) -> softmax -> masked_fill(0) semantics.
        attn = jnp.where(masked, NEG, attn)
        m_prev = m_sc[...]
        m_new = jnp.maximum(m_prev, jnp.max(attn, axis=-1, keepdims=True))
        alpha = jnp.exp(m_prev - m_new)
        p_ = jnp.where(masked, 0.0, jnp.exp(attn - m_new))
        l_sc[...] = alpha * l_sc[...] + jnp.sum(p_, axis=-1, keepdims=True)
        acc_sc[...] = alpha * acc_sc[...] + jnp.dot(
            p_.astype(v.dtype), v, preferred_element_type=f32)
        m_sc[...] = m_new

    @pl.when(j == nkb - 1)
    def _finalize():
        l = l_sc[...]
        l = jnp.where(l == 0.0, 1.0, l)     # fully-masked rows -> zero output (matches ref)
        o_ref[0, 0] = (acc_sc[...] * pl.reciprocal(l, approx=True)).astype(o_ref.dtype)


def cope_attention_core(q, k, v, pos_emb, *, npos_max, seq_len, block=128):
    """q: (B,nH,S,D) bf16 (pre-scaled by 1/sqrt(D)); k,v: (B,nKV,S,D) bf16;
    pos_emb: (D,npos) bf16 (pre-scaled by sqrt(D)). Returns (B,nH,S,D) bf16."""
    B, nH, S, D = q.shape
    nKV = k.shape[1]
    n_rep = nH // nKV
    npos = pos_emb.shape[-1]

    T = min(block, _round_up(S, 8))
    Sp = _round_up(S, T)
    pad = ((0, 0), (0, 0), (0, Sp - S), (0, 0))
    qp = jnp.pad(q, pad)
    kp = jnp.pad(k, pad)
    vp = jnp.pad(v, pad)
    nq = Sp // T
    nkb = Sp // T

    kernel = partial(_cope_attn_kernel, npos_max=npos_max, seq_len=seq_len,
                     block_q=T, block_k=T)
    out = pl.pallas_call(
        kernel,
        out_shape=jax.ShapeDtypeStruct((B, nH, Sp, D), jnp.bfloat16),
        grid_spec=pltpu.PrefetchScalarGridSpec(
            num_scalar_prefetch=0,
            grid=(B, nH, nq, nkb),
            in_specs=[
                pl.BlockSpec((1, 1, T, D), lambda b, h, i, j: (b, h, i, 0)),
                # repeat_kv via index_map (h -> h // n_rep); kv blocks walked in reverse.
                pl.BlockSpec((1, 1, T, D), lambda b, h, i, j: (b, h // n_rep, nkb - 1 - j, 0)),
                pl.BlockSpec((1, 1, T, D), lambda b, h, i, j: (b, h // n_rep, nkb - 1 - j, 0)),
                pl.BlockSpec((D, npos), lambda b, h, i, j: (0, 0)),
            ],
            out_specs=pl.BlockSpec((1, 1, T, D), lambda b, h, i, j: (b, h, i, 0)),
            scratch_shapes=[
                pltpu.VMEM((T, 1), jnp.float32),     # running max m
                pltpu.VMEM((T, 1), jnp.float32),     # running denom l
                pltpu.VMEM((T, 1), jnp.float32),     # reverse-cumsum carry of gates
                pltpu.VMEM((T, D), jnp.float32),     # output accumulator
                pltpu.VMEM((T, npos), jnp.float32),  # Q @ pos_emb (per q block)
            ]),
        compiler_params=pltpu.CompilerParams(
            dimension_semantics=("parallel", "parallel", "parallel", "arbitrary")),
    )(qp, kp, vp, pos_emb)
    return out[:, :, :S, :]


# ----------------------------------- module wrapper ----------------------------------- #

def cope_llama_attention(hidden_states, attention_mask, params, *,
                         num_heads, num_kv_heads, head_dim, npos_max):
    assert attention_mask.ndim == 4, "mask must be 4-D (B, 1, q_len, kv_len)"
    B, S, H = hidden_states.shape
    D = head_dim
    bf16 = jnp.bfloat16
    x2d = hidden_states.reshape(B * S, H).astype(jnp.float32)

    # Fused q/k/v projection: activations read once, one tiled GEMM.
    w_qkv = jnp.concatenate([params["wq"], params["wk"], params["wv"]], axis=1)
    qkv = pallas_matmul(x2d, w_qkv)                         # (B*S, (nH+2*nKV)*D) f32
    qd, kvd = num_heads * D, num_kv_heads * D
    q = qkv[:, :qd]
    k = qkv[:, qd:qd + kvd]
    v = qkv[:, qd + kvd:qd + 2 * kvd]

    Q = q.reshape(B, S, num_heads, D).transpose(0, 2, 1, 3)
    K = k.reshape(B, S, num_kv_heads, D).transpose(0, 2, 1, 3)
    V = v.reshape(B, S, num_kv_heads, D).transpose(0, 2, 1, 3)

    # Fold 1/sqrt(D) into Q (and sqrt(D) into pos_emb so Q @ pos_emb is unchanged);
    # cast MXU operands to bf16, keep accumulation/elementwise math f32 in-kernel.
    inv_scale = 1.0 / math.sqrt(D)
    Qb = (Q * inv_scale).astype(bf16)
    Kb = K.astype(bf16)
    Vb = V.astype(bf16)
    peb = (params["pos_emb"] * math.sqrt(D)).astype(bf16)

    out = cope_attention_core(Qb, Kb, Vb, peb, npos_max=npos_max, seq_len=S)

    out = (out.transpose(0, 2, 1, 3).reshape(B * S, num_heads * D))
    out = pallas_matmul(out, params["wo"]).reshape(B, S, H)
    return out


# --------------------------------- pure-JAX reference --------------------------------- #
# Mirrors the kernel's precision policy (bf16 matmul operands, f32 accumulation, f32
# softmax/CoPE math) so the comparison validates the Pallas implementation.

def reference(hidden_states, attention_mask, params, *,
              num_heads, num_kv_heads, head_dim, npos_max):
    B, S, H = hidden_states.shape
    D = head_dim
    bf16 = jnp.bfloat16
    x = hidden_states.astype(jnp.float32).reshape(B * S, H)

    def mm(a, b):
        return jnp.dot(a.astype(bf16), b.astype(bf16), preferred_element_type=jnp.float32)

    Q = mm(x, params["wq"]).reshape(B, S, num_heads, D).transpose(0, 2, 1, 3)
    K = mm(x, params["wk"]).reshape(B, S, num_kv_heads, D).transpose(0, 2, 1, 3)
    V = mm(x, params["wv"]).reshape(B, S, num_kv_heads, D).transpose(0, 2, 1, 3)
    n_rep = num_heads // num_kv_heads
    K = jnp.repeat(K, n_rep, axis=1)
    V = jnp.repeat(V, n_rep, axis=1)

    Qb = (Q / math.sqrt(D)).astype(bf16)
    Kb = K.astype(bf16)
    Vb = V.astype(bf16)
    peb = (params["pos_emb"] * math.sqrt(D)).astype(bf16)

    logits = jnp.einsum('bhqd,bhkd->bhqk', Qb, Kb, preferred_element_type=jnp.float32)
    cm = attention_mask[:, :, :, :S].astype(jnp.float32)
    bm = cm != 0.0
    logits = logits + cm
    gates = jax.nn.sigmoid(logits)
    pos = jnp.flip(jnp.cumsum(jnp.flip(gates, -1), -1), -1)
    pos = jnp.minimum(pos, float(npos_max - 1))
    pc = jnp.ceil(pos).astype(jnp.int32)
    pf = jnp.floor(pos).astype(jnp.int32)
    li = jnp.einsum('bhqd,dp->bhqp', Qb, peb, preferred_element_type=jnp.float32)
    lc = jnp.take_along_axis(li, pc, axis=-1)
    lf = jnp.take_along_axis(li, pf, axis=-1)
    w = pos - pf
    logits = logits + lc * w + lf * (1.0 - w)
    logits = jnp.where(bm, jnp.finfo(jnp.float32).min, logits)
    score = jax.nn.softmax(logits, axis=-1)
    score = jnp.where(bm, 0.0, score)
    out = jnp.einsum('bhqk,bhkd->bhqd', score.astype(bf16), Vb,
                     preferred_element_type=jnp.float32)
    out = out.transpose(0, 2, 1, 3).reshape(B * S, num_heads * D)
    out = mm(out, params["wo"])
    return out.reshape(B, S, H)


# ---------------------------------------- main ---------------------------------------- #

if __name__ == "__main__":
    B, S = 2, 8
    hidden_size = 32
    num_heads = 4
    num_kv_heads = 2
    head_dim = hidden_size // num_heads      # 8
    npos_max = 8

    key = jax.random.PRNGKey(0)
    kx, kq, kk, kv, ko, kp = jax.random.split(key, 6)

    hidden_states = jax.random.normal(kx, (B, S, hidden_size), jnp.float32)

    params = {
        "wq": 0.1 * jax.random.normal(kq, (hidden_size, num_heads * head_dim), jnp.float32),
        "wk": 0.1 * jax.random.normal(kk, (hidden_size, num_kv_heads * head_dim), jnp.float32),
        "wv": 0.1 * jax.random.normal(kv, (hidden_size, num_kv_heads * head_dim), jnp.float32),
        "wo": 0.1 * jax.random.normal(ko, (num_heads * head_dim, hidden_size), jnp.float32),
        # nn.Parameter(torch.zeros(1,1,head_dim,npos_max)) -> random so CoPE is exercised.
        "pos_emb": 0.5 * jax.random.normal(kp, (head_dim, npos_max), jnp.float32),
    }

    # 4-D additive causal mask (B, 1, S, S): 0 where allowed, finfo.min where masked.
    neg = jnp.finfo(jnp.float32).min
    causal = jnp.tril(jnp.ones((S, S), jnp.bool_))
    attention_mask = jnp.where(causal, 0.0, neg)[None, None, :, :]
    attention_mask = jnp.broadcast_to(attention_mask, (B, 1, S, S))

    out = cope_llama_attention(
        hidden_states, attention_mask, params,
        num_heads=num_heads, num_kv_heads=num_kv_heads,
        head_dim=head_dim, npos_max=npos_max)
    out = jax.block_until_ready(out)

    ref = reference(
        hidden_states, attention_mask, params,
        num_heads=num_heads, num_kv_heads=num_kv_heads,
        head_dim=head_dim, npos_max=npos_max)

    assert out.shape == (B, S, hidden_size)
    assert bool(jnp.all(jnp.isfinite(out)))
    assert bool(jnp.allclose(out, ref, atol=1e-2, rtol=1e-2)), (
        f"max abs err {float(jnp.max(jnp.abs(out - ref)))}")

    print("KERNEL_OK")
</pallas_src>

<mosaic_0001>
module attributes {stable_mosaic.version = 11 : i64} {
  func.func @_matmul_kernel(%arg0: i32, %arg1: i32, %arg2: i32, %arg3: memref<16x128xbf16, #tpu.memory_space<vmem>>, %arg4: memref<128x128xbf16, #tpu.memory_space<vmem>>, %arg5: memref<16x128xf32, #tpu.memory_space<vmem>>, %arg6: memref<16x128xf32, #tpu.memory_space<vmem>>) attributes {dimension_semantics = [#tpu.dimension_semantics<parallel>, #tpu.dimension_semantics<parallel>, #tpu.dimension_semantics<arbitrary>], iteration_bounds = array<i64: 1, 1, 1>, scalar_prefetch = 0 : i64, scratch_operands = 1 : i64, tpu.core_type = #tpu.core_type<tc>, window_params = [{transform_indices = @transform_0, window_bounds = array<i64: 16, 128>}, {transform_indices = @transform_1, window_bounds = array<i64: 128, 128>}, {transform_indices = @transform_2, window_bounds = array<i64: 16, 128>}]} {
    %c0_i32 = arith.constant 0 : i32
    %0 = arith.cmpi eq, %arg2, %c0_i32 : i32
    %1 = arith.extui %0 : i1 to i32
    %c0_i32_0 = arith.constant 0 : i32
    %2 = arith.cmpi ne, %1, %c0_i32_0 : i32
    scf.if %2 {
      %cst_10 = arith.constant 0.000000e+00 : f32
      %12 = vector.broadcast %cst_10 : f32 to vector<16x128xf32>
      %c0_11 = arith.constant 0 : index
      %c0_12 = arith.constant 0 : index
      %13 = vector.load %arg6[%c0_11, %c0_12] : memref<16x128xf32, #tpu.memory_space<vmem>>, vector<16x128xf32>
      tpu.vector_store %arg6[%c0_11, %c0_12], %12 {strides = array<i32>} : memref<16x128xf32, #tpu.memory_space<vmem>>, vector<16x128xf32>,
    } else {
    }
    %c0 = arith.constant 0 : index
    %c0_1 = arith.constant 0 : index
    %3 = vector.load %arg6[%c0, %c0_1] : memref<16x128xf32, #tpu.memory_space<vmem>>, vector<16x128xf32>
    %c0_2 = arith.constant 0 : index
    %c0_3 = arith.constant 0 : index
    %4 = vector.load %arg3[%c0_2, %c0_3] : memref<16x128xbf16, #tpu.memory_space<vmem>>, vector<16x128xbf16>
    %c0_4 = arith.constant 0 : index
    %c0_5 = arith.constant 0 : index
    %5 = vector.load %arg4[%c0_4, %c0_5] : memref<128x128xbf16, #tpu.memory_space<vmem>>, vector<128x128xbf16>
    %cst = arith.constant dense<0.000000e+00> : vector<16x128xf32>
    %6 = tpu.matmul %4, %5, %cst {dimension_numbers = #tpu.dot_dimension_numbers<[1], [0], [0], [1], [0, 0, 1, 1], [], []>} : vector<16x128xbf16>, vector<128x128xbf16>, vector<16x128xf32> -> vector<16x128xf32>
    %7 = arith.addf %3, %6 : vector<16x128xf32>
    %c0_6 = arith.constant 0 : index
    %c0_7 = arith.constant 0 : index
    %8 = vector.load %arg6[%c0_6, %c0_7] : memref<16x128xf32, #tpu.memory_space<vmem>>, vector<16x128xf32>
    tpu.vector_store %arg6[%c0_6, %c0_7], %7 {strides = array<i32>} : memref<16x128xf32, #tpu.memory_space<vmem>>, vector<16x128xf32>,
    %c0_i32_8 = arith.constant 0 : i32
    %9 = arith.cmpi eq, %arg2, %c0_i32_8 : i32
    %10 = arith.extui %9 : i1 to i32
    %c0_i32_9 = arith.constant 0 : i32
    %11 = arith.cmpi ne, %10, %c0_i32_9 : i32
    scf.if %11 {
      %c0_10 = arith.constant 0 : index
      %c0_11 = arith.constant 0 : index
      %12 = vector.load %arg6[%c0_10, %c0_11] : memref<16x128xf32, #tpu.memory_space<vmem>>, vector<16x128xf32>
      %c0_12 = arith.constant 0 : index
      %c0_13 = arith.constant 0 : index
      %13 = vector.load %arg5[%c0_12, %c0_13] : memref<16x128xf32, #tpu.memory_space<vmem>>, vector<16x128xf32>
      tpu.vector_store %arg5[%c0_12, %c0_13], %12 {strides = array<i32>} : memref<16x128xf32, #tpu.memory_space<vmem>>, vector<16x128xf32>,
    } else {
    }
    return
  }
  func.func @transform_0(%arg0: i32, %arg1: i32, %arg2: i32) -> (i32, i32) {
    %c0_i32 = arith.constant 0 : i32
    return %arg0, %arg2 : i32, i32
  }
  func.func @transform_1(%arg0: i32, %arg1: i32, %arg2: i32) -> (i32, i32) {
    %c0_i32 = arith.constant 0 : i32
    return %arg2, %arg1 : i32, i32
  }
  func.func @transform_2(%arg0: i32, %arg1: i32, %arg2: i32) -> (i32, i32) {
    %c0_i32 = arith.constant 0 : i32
    return %arg0, %arg1 : i32, i32
  }
}

</mosaic_0001>

<llo_original>
// kernel: tpu_custom_call.1
$region0: #{tpu_custom_call.1}
  #allocation0 [shape = 'u32[]', space=smem, size = 0x4, offset = 0x4, fixed_abs, tag = 'smem constant byte address 0x4 - core index']
  #allocation1 [shape = 'u32[144,128]{1,0:T(1,128)}', space=vmem, size = 0x12000, scoped, tag = 'internal scratch']
  #allocation2 [shape = 'f32[16,128]{1,0:T(8,128)}', space=vmem, size = 0x2000, scoped, tag = 'scratch operand']
  %s0 = inlined_call_operand.hbm [shape: bf16[16,128], index: 0, kind: input, shape index: {}]
  %s1 = inlined_call_operand.hbm [shape: bf16[128,128], index: 1, kind: input, shape index: {}]
  %s2 = inlined_call_operand.hbm [shape: f32[16,128], index: 2, kind: output, shape index: {}]
  %s3 = sld [smem:[#allocation0]]
  $region34: #{tpu_custom_call.1} parent=0
    _
  %s5 = ssub.s32 1, %s3
  %s6 = scalar_select 0, %s5, %s3
  $region1: #{tpu_custom_call.1} parent=0
    #allocation3 [shape = 'u8[4096]{0}', space=vmem, size = 0x1000, scoped, tag = 'input window, operand 0, single buffered']
    #allocation4 [shape = 's32[1]{0}', space=sflag, size = 0x4, scoped, tag = 'scoped memory for tpu_custom_call.1']
    #allocation5 [shape = 's32[1]{0}', space=sflag, size = 0x4, scoped, tag = 'scoped memory for tpu_custom_call.1']
    #allocation6 [shape = 'u8[32768]{0}', space=vmem, size = 0x8000, scoped, tag = 'input window, operand 1, single buffered']
    #allocation7 [shape = 's32[1]{0}', space=sflag, size = 0x4, scoped, tag = 'scoped memory for tpu_custom_call.1']
    #allocation8 [shape = 'u8[8192]{0}', space=vmem, size = 0x2000, scoped, tag = 'output window, operand 0, single buffered']
    %7 = vsyncpa [#allocation4], 0
    %8 = vsyncpa [#allocation7], 0
    %9 = vsyncpa [#allocation5], 0
    // Predicated region
    $region2: #{tpu_custom_call.1} parent=1 // pred_check
      _
    $region3: #{tpu_custom_call.1} parent=1 // pred_check_branch
      %11 = sbr.rel (0) target = $region5
    $region4: #{tpu_custom_call.1} parent=1 // pred_region
      %s13 = ssub.s32 128, 128
      %14 = vsyncadd [#allocation4], %s13
      %s15 = sshll.u32 [#allocation3], 4
      %s16 = int_to_ptr.vmem [resolvable:$true] %s15
      %21 = dma.hbm_to_vmem [thread:$0]  %s0, 128, %s16, [#allocation4], 64, 64, 4
    $region5: #{tpu_custom_call.1} parent=1 // pred_fallthru
      _
    // Predicated region
    $region6: #{tpu_custom_call.1} parent=1 // pred_check
      _
    $region7: #{tpu_custom_call.1} parent=1 // pred_check_branch
      %23 = sbr.rel (0) target = $region9
    $region8: #{tpu_custom_call.1} parent=1 // pred_region
      %s25 = ssub.s32 1024, 1024
      %26 = vsyncadd [#allocation7], %s25
      %s27 = sshll.u32 [#allocation6], 4
      %s28 = int_to_ptr.vmem [resolvable:$true] %s27
      %33 = dma.hbm_to_vmem [thread:$0]  %s1, 1024, %s28, [#allocation7], 64, 64, 4
    $region9: #{tpu_custom_call.1} parent=1 // pred_fallthru
      _
    // Predicated region
    $region10: #{tpu_custom_call.1} parent=1 // pred_check
      _
    $region11: #{tpu_custom_call.1} parent=1 // pred_check_branch
      %35 = sbr.rel (0) target = $region13
    $region12: #{tpu_custom_call.1} parent=1 // pred_region
      %36 = dma.done [#allocation4], 128
    $region13: #{tpu_custom_call.1} parent=1 // pred_fallthru
      _
    // Predicated region
    $region14: #{tpu_custom_call.1} parent=1 // pred_check
      _
    $region15: #{tpu_custom_call.1} parent=1 // pred_check_branch
      %38 = sbr.rel (0) target = $region17
    $region16: #{tpu_custom_call.1} parent=1 // pred_region
      %39 = dma.done [#allocation7], 1024
    $region17: #{tpu_custom_call.1} parent=1 // pred_fallthru
      _
    %p41 = scmp.eq.s32.totalorder 0, 0
    // Predicated region
    $region18: #{tpu_custom_call.1} parent=1 // pred_check
      %p42 = pneg %p41
    $region19: #{tpu_custom_call.1} parent=1 // pred_check_branch
      %44 = sbr.rel (%p42) target = $region21
    $region20: #{tpu_custom_call.1} parent=1 // pred_region
      %45 = vst [vmem:[#allocation2] sm:$0xff] 0.0
      %46 = vst [vmem:[#allocation2 + $0x8] sm:$0xff] 0.0
    $region21: #{tpu_custom_call.1} parent=1 // pred_fallthru
      _
    %v47 = vld [vmem:[#allocation2] sm:$0xff]
    %v48 = vld [vmem:[#allocation2 + $0x8] sm:$0xff]
    %v49 = vld [vmem:[#allocation3] sm:$0xf]
    %v50 = vld [vmem:[#allocation3 + $0x4] sm:$0xf]
    %v51 = vld [vmem:[#allocation6] sm:$0xf]
    %v52 = vld [vmem:[#allocation6 + $0x4] sm:$0xf]
    %v53 = vld [vmem:[#allocation6 + $0x8] sm:$0xf]
    %v54 = vld [vmem:[#allocation6 + $0xc] sm:$0xf]
    %v55 = vld [vmem:[#allocation6 + $0x10] sm:$0xf]
    %v56 = vld [vmem:[#allocation6 + $0x14] sm:$0xf]
    %v57 = vld [vmem:[#allocation6 + $0x18] sm:$0xf]
    %v58 = vld [vmem:[#allocation6 + $0x1c] sm:$0xf]
    %v59 = vld [vmem:[#allocation6 + $0x20] sm:$0xf]
    %v60 = vld [vmem:[#allocation6 + $0x24] sm:$0xf]
    %v61 = vld [vmem:[#allocation6 + $0x28] sm:$0xf]
    %v62 = vld [vmem:[#allocation6 + $0x2c] sm:$0xf]
    %v63 = vld [vmem:[#allocation6 + $0x30] sm:$0xf]
    %v64 = vld [vmem:[#allocation6 + $0x34] sm:$0xf]
    %v65 = vld [vmem:[#allocation6 + $0x38] sm:$0xf]
    %v66 = vld [vmem:[#allocation6 + $0x3c] sm:$0xf]
    %v69 = vunpack.c.l.b16 %v49
    %v70 = vunpack.c.l.b16 %v50
    %v71 = vpack.c.b16 %v70, %v69
    %v89 = vunpack.c.l.b16 %v51
    %v90 = vunpack.c.l.b16 %v52
    %v91 = vunpack.c.l.b16 %v53
    %v92 = vunpack.c.l.b16 %v54
    %v93 = vunpack.c.l.b16 %v55
    %v94 = vunpack.c.l.b16 %v56
    %v95 = vunpack.c.l.b16 %v57
    %v96 = vunpack.c.l.b16 %v58
    %v97 = vunpack.c.l.b16 %v59
    %v98 = vunpack.c.l.b16 %v60
    %v99 = vunpack.c.l.b16 %v61
    %v100 = vunpack.c.l.b16 %v62
    %v101 = vunpack.c.l.b16 %v63
    %v102 = vunpack.c.l.b16 %v64
    %v103 = vunpack.c.l.b16 %v65
    %v104 = vunpack.c.l.b16 %v66
    %v105 = vpack.c.b16 %v90, %v89
    %v106 = vpack.c.b16 %v92, %v91
    %v107 = vpack.c.b16 %v94, %v93
    %v108 = vpack.c.b16 %v96, %v95
    %v109 = vpack.c.b16 %v98, %v97
    %v110 = vpack.c.b16 %v100, %v99
    %v111 = vpack.c.b16 %v102, %v101
    %v112 = vpack.c.b16 %v104, %v103
    %121 = vmatprep.subr.bf16.mxu0 0
    %122 = vmatpush1.bf16.msra.mxu0 %v112
    %123 = vmatprep.subr.bf16.mxu0 0
    %124 = vmatpush1.bf16.msra.mxu0 %v111
    %125 = vmatprep.subr.bf16.mxu0 0
    %126 = vmatpush1.bf16.msra.mxu0 %v110
    %127 = vmatprep.subr.bf16.mxu0 0
    %128 = vmatpush1.bf16.msra.mxu0 %v109
    %129 = vmatprep.subr.bf16.mxu0 0
    %130 = vmatpush1.bf16.msra.mxu0 %v108
    %131 = vmatprep.subr.bf16.mxu0 0
    %132 = vmatpush1.bf16.msra.mxu0 %v107
    %133 = vmatprep.subr.bf16.mxu0 0
    %134 = vmatpush1.bf16.msra.mxu0 %v106
    %135 = vmatprep.subr.bf16.mxu0 0
    %136 = vmatpush1.bf16.msra.mxu0 %v105
    %137 = vmatprep.subr.bf16.mxu0 0
    %138 = vmatpush2.bf16.msra.mxu0 0
    %139 = vmatprep.subr.bf16.mxu0 0
    %140 = vmatpush2.bf16.msra.mxu0 0
    %141 = vmatprep.subr.bf16.mxu0 0
    %142 = vmatpush2.bf16.msra.mxu0 0
    %143 = vmatprep.subr.bf16.mxu0 0
    %144 = vmatpush2.bf16.msra.mxu0 0
    %145 = vmatprep.subr.bf16.mxu0 0
    %146 = vmatpush2.bf16.msra.mxu0 0
    %147 = vmatprep.subr.bf16.mxu0 0
    %148 = vmatpush2.bf16.msra.mxu0 0
    %149 = vmatprep.subr.bf16.mxu0 0
    %150 = vmatpush2.bf16.msra.mxu0 0
    %151 = vmatprep.subr.bf16.mxu0 0
    %152 = vmatpush2.bf16.msra.mxu0 0
    %153 = vmatprep.mubr.bf16.mxu0 0
    %154 = vmatmul.mubr.bf16.gmra.mxu0 %v71
    %v155 = vpop.f32.mrf.mxu0
    %v156 = vadd.f32 0.0, %v155
    %v157 = vpop.f32.mrf.mxu0
    %v158 = vpop.f32.mrf.mxu0
    %v159 = vadd.f32 0.0, %v158
    %v160 = vpop.f32.mrf.mxu0
    %161 = vdwg.mxu0
    %v162 = vadd.f32 %v47, %v156
    %v163 = vadd.f32 %v48, %v159
    %164 = vst [vmem:[#allocation2] sm:$0xff] %v162
    %165 = vst [vmem:[#allocation2 + $0x8] sm:$0xff] %v163
    // Predicated region
    $region22: #{tpu_custom_call.1} parent=1 // pred_check
      %p166 = pneg %p41
    $region23: #{tpu_custom_call.1} parent=1 // pred_check_branch
      %168 = sbr.rel (%p166) target = $region25
    $region24: #{tpu_custom_call.1} parent=1 // pred_region
      %v169 = vld [vmem:[#allocation2] sm:$0xff]
      %v170 = vld [vmem:[#allocation2 + $0x8] sm:$0xff]
      %171 = vst [vmem:[#allocation8] sm:$0xff] %v169
      %172 = vst [vmem:[#allocation8 + $0x8] sm:$0xff] %v170
    $region25: #{tpu_custom_call.1} parent=1 // pred_fallthru
      _
    // Predicated region
    $region26: #{tpu_custom_call.1} parent=1 // pred_check
      _
    $region27: #{tpu_custom_call.1} parent=1 // pred_check_branch
      %174 = sbr.rel (0) target = $region29
    $region28: #{tpu_custom_call.1} parent=1 // pred_region
      %s176 = ssub.s32 256, 256
      %177 = vsyncadd [#allocation5], %s176
      %s178 = sshll.u32 [#allocation8], 4
      %s179 = int_to_ptr.vmem [resolvable:$true] %s178
      %184 = dma.vmem_to_hbm [thread:$0]  %s179, 256, %s2, [#allocation5], 128, 128, 8
    $region29: #{tpu_custom_call.1} parent=1 // pred_fallthru
      _
    // Predicated region
    $region30: #{tpu_custom_call.1} parent=1 // pred_check
      _
    $region31: #{tpu_custom_call.1} parent=1 // pred_check_branch
      %186 = sbr.rel (0) target = $region33
    $region32: #{tpu_custom_call.1} parent=1 // pred_region
      %187 = dma.done [#allocation5], 256
    $region33: #{tpu_custom_call.1} parent=1 // pred_fallthru
      _
    %188 = vsyncpa [#allocation4], 1
    %189 = vsyncpa [#allocation7], 1
    %190 = vsyncpa [#allocation5], 1

</llo_original>
